<compile_context>
chip_gen: v5e
topology: v5e:2x2
jax: 0.10.0
libtpu: 0.0.40
codegen_flags: <defaults>
</compile_context>

<pallas_src>
import functools
import math

import jax
import jax.numpy as jnp
from jax.experimental import pallas as pl
from jax.experimental.pallas import tpu as pltpu

LANES = 128
SUBLANES = 8
_MAX_TILE_ROWS = 4096           # hard cap on rows per block
_TARGET_BLOCK_BYTES = 2 << 20   # ~2 MiB lane-padded f32 footprint per input block
_VMEM_LIMIT_BYTES = 48 * 1024 * 1024


def _elementwise_loss(pred, target, loss_type):
    d = pred - target
    if loss_type == "l1":        # F.smooth_l1_loss, default beta = 1.0
        ad = jnp.abs(d)
        return jnp.where(ad < 1.0, 0.5 * d * d, ad - 0.5)
    elif loss_type == "l2":      # F.mse_loss
        return d * d
    raise ValueError(f"unknown loss_type {loss_type!r}")


def _weighted_loss_kernel(p_ref, t_ref, m_ref, r_out, rc_out, *,
                          loss_type, n_rows, tile_rows, needs_mask):
    """Accumulate per-row r = A/(B+1e-6) and r*C into resident output accumulators."""
    j = pl.program_id(1)          # row-tile index within the split ("arbitrary")

    @pl.when(j == 0)
    def _():
        r_out[...] = jnp.zeros_like(r_out)
        rc_out[...] = jnp.zeros_like(rc_out)

    p = p_ref[...].astype(jnp.float32)
    t = t_ref[...].astype(jnp.float32)
    m = m_ref[...].astype(jnp.float32)

    loss = _elementwise_loss(p, t, loss_type)

    a = jnp.sum(t * m, axis=-1, keepdims=True)       # (tile_rows, 1)
    b = jnp.sum(m, axis=-1, keepdims=True)           # (tile_rows, 1)
    c = jnp.sum(loss * m, axis=-1, keepdims=True)    # (tile_rows, 1)

    if needs_mask:
        # Rows past the true end (partial last tile / clamped duplicate tile) -> 0.
        s = pl.program_id(0)
        row_block = s * pl.num_programs(1) + j
        row_ids = (row_block * tile_rows
                   + jax.lax.broadcasted_iota(jnp.int32, a.shape, 0))
        valid = row_ids < n_rows
        a = jnp.where(valid, a, 0.0)
        b = jnp.where(valid, b, 0.0)
        c = jnp.where(valid, c, 0.0)

    r = a / (b + jnp.float32(1e-6))
    r_out[...] += r
    rc_out[...] += r * c


def _choose_tile_rows(n_rows, n_cols):
    # Size by the lane-padded f32 footprint (what the in-kernel temporaries cost),
    # independent of the (possibly narrower) input dtypes.
    padded_cols = -(-n_cols // LANES) * LANES
    rows = _TARGET_BLOCK_BYTES // (padded_cols * 4)
    rows = max(SUBLANES, (rows // SUBLANES) * SUBLANES)
    rows = min(rows, _MAX_TILE_ROWS)
    if n_rows <= rows:
        return n_rows          # single block covering all rows (full-dim block is always legal)
    return rows


def masked_smooth_l1_loss_weighted(prediction, target, mask, loss_type="l1"):
    """Forward pass of MaskedSmoothL1LossWeighted. Returns a float32 scalar."""
    assert prediction.shape == target.shape == mask.shape
    assert prediction.ndim >= 2, "expects (batch, ..., W) tensors"

    shape = prediction.shape
    batch = shape[0]
    w = shape[-1]
    n_rows = math.prod(shape[:-1])
    n_total = math.prod(shape)

    # Pure reshapes: no padding, no dtype casts (casting happens in-kernel).
    p2 = jnp.reshape(prediction, (n_rows, w))
    t2 = jnp.reshape(target, (n_rows, w))
    m2 = jnp.reshape(mask, (n_rows, w))

    tile_rows = _choose_tile_rows(n_rows, w)
    n_blocks = -(-n_rows // tile_rows)

    # v7x megacore: split row tiles across the two TensorCores whenever there is
    # more than one tile of work; on single-core parts this is just a serial loop.
    splits = 2 if n_blocks >= 2 else 1
    blocks_per_split = -(-n_blocks // splits)
    needs_mask = splits * blocks_per_split * tile_rows != n_rows

    def in_map(s, j):
        blk = s * blocks_per_split + j
        # At most one overflow step when n_blocks is odd: clamp it onto a valid
        # block; its rows are zeroed in-kernel via the row-id mask.
        return (jnp.minimum(blk, n_blocks - 1), 0)

    in_spec = pl.BlockSpec((tile_rows, w), in_map)
    out_spec = pl.BlockSpec((None, tile_rows, 1), lambda s, j: (s, 0, 0))

    kernel = functools.partial(_weighted_loss_kernel, loss_type=loss_type,
                               n_rows=n_rows, tile_rows=tile_rows,
                               needs_mask=needs_mask)

    bytes_in = (p2.size * p2.dtype.itemsize + t2.size * t2.dtype.itemsize
                + m2.size * m2.dtype.itemsize)
    cost = pl.CostEstimate(flops=9 * n_total, transcendentals=0,
                           bytes_accessed=bytes_in + 2 * splits * tile_rows * 4)

    r_part, rc_part = pl.pallas_call(
        kernel,
        out_shape=(jax.ShapeDtypeStruct((splits, tile_rows, 1), jnp.float32),
                   jax.ShapeDtypeStruct((splits, tile_rows, 1), jnp.float32)),
        grid_spec=pltpu.PrefetchScalarGridSpec(
            num_scalar_prefetch=0,
            grid=(splits, blocks_per_split),
            in_specs=[in_spec, in_spec, in_spec],
            out_specs=[out_spec, out_spec],
        ),
        compiler_params=pltpu.CompilerParams(
            dimension_semantics=("parallel", "arbitrary"),
            vmem_limit_bytes=_VMEM_LIMIT_BYTES),
        cost_estimate=cost,
    )(p2, t2, m2)

    # Tiny final reduction (<= splits * tile_rows values) + scalar normalisation.
    sum_r = jnp.sum(r_part)
    sum_rc = jnp.sum(rc_part)
    return (jnp.float32(batch) * sum_rc) / (sum_r * jnp.float32(n_total))


def _reference(prediction, target, mask, loss_type="l1"):
    iw = (target * mask).sum(-1, keepdims=True) / (mask.sum(-1, keepdims=True) + 1e-6)
    iw = iw / iw.sum() * prediction.shape[0]
    loss = _elementwise_loss(prediction, target, loss_type)
    return jnp.mean(loss * mask * iw)


if __name__ == "__main__":
    key = jax.random.PRNGKey(0)
    k1, k2, k3 = jax.random.split(key, 3)

    # NCHW, small shapes: batch=2, channels=4, spatial=16x16
    shape = (2, 4, 16, 16)
    prediction = jax.random.normal(k1, shape, dtype=jnp.float32) * 2.0
    target = jax.random.normal(k2, shape, dtype=jnp.float32)
    mask = (jax.random.uniform(k3, shape) > 0.5).astype(jnp.float32)

    loss_fn = jax.jit(masked_smooth_l1_loss_weighted, static_argnames="loss_type")

    out_l1 = loss_fn(prediction, target, mask, loss_type="l1")
    out_l2 = loss_fn(prediction, target, mask, loss_type="l2")
    jax.block_until_ready(out_l1)
    jax.block_until_ready(out_l2)

    ref_l1 = _reference(prediction, target, mask, "l1")
    ref_l2 = _reference(prediction, target, mask, "l2")

    assert jnp.allclose(out_l1, ref_l1, rtol=1e-4, atol=1e-6), (out_l1, ref_l1)
    assert jnp.allclose(out_l2, ref_l2, rtol=1e-4, atol=1e-6), (out_l2, ref_l2)

    print("KERNEL_OK")
</pallas_src>

<mosaic_0001>
module attributes {stable_mosaic.version = 11 : i64} {
  func.func @_weighted_loss_kernel(%arg0: i32, %arg1: i32, %arg2: memref<128x16xf32, #tpu.memory_space<vmem>>, %arg3: memref<128x16xf32, #tpu.memory_space<vmem>>, %arg4: memref<128x16xf32, #tpu.memory_space<vmem>>, %arg5: memref<1x128x1xf32, #tpu.memory_space<vmem>>, %arg6: memref<1x128x1xf32, #tpu.memory_space<vmem>>) attributes {dimension_semantics = [#tpu.dimension_semantics<parallel>, #tpu.dimension_semantics<arbitrary>], iteration_bounds = array<i64: 1, 1>, scalar_prefetch = 0 : i64, scratch_operands = 0 : i64, tpu.core_type = #tpu.core_type<tc>, window_params = [{transform_indices = @transform_0, window_bounds = array<i64: 128, 16>}, {transform_indices = @transform_1, window_bounds = array<i64: 128, 16>}, {transform_indices = @transform_2, window_bounds = array<i64: 128, 16>}, {transform_indices = @transform_3, window_bounds = array<i64: 1, 128, 1>}, {transform_indices = @transform_4, window_bounds = array<i64: 1, 128, 1>}]} {
    %c0_i32 = arith.constant 0 : i32
    %0 = arith.cmpi eq, %arg1, %c0_i32 : i32
    %1 = arith.extui %0 : i1 to i32
    %c0_i32_0 = arith.constant 0 : i32
    %2 = arith.cmpi ne, %1, %c0_i32_0 : i32
    scf.if %2 {
      %cst_24 = arith.constant 0.000000e+00 : f32
      %40 = vector.broadcast %cst_24 : f32 to vector<128x1xf32>
      %c0_25 = arith.constant 0 : index
      %c0_26 = arith.constant 0 : index
      %c0_27 = arith.constant 0 : index
      %41 = vector.load %arg5[%c0_25, %c0_26, %c0_27] : memref<1x128x1xf32, #tpu.memory_space<vmem>>, vector<1x128x1xf32>
      %42 = vector.shape_cast %41 : vector<1x128x1xf32> to vector<128x1xf32>
      %43 = vector.shape_cast %40 : vector<128x1xf32> to vector<1x128x1xf32>
      tpu.vector_store %arg5[%c0_25, %c0_26, %c0_27], %43 {strides = array<i32>} : memref<1x128x1xf32, #tpu.memory_space<vmem>>, vector<1x128x1xf32>,
      %cst_28 = arith.constant 0.000000e+00 : f32
      %44 = vector.broadcast %cst_28 : f32 to vector<128x1xf32>
      %c0_29 = arith.constant 0 : index
      %c0_30 = arith.constant 0 : index
      %c0_31 = arith.constant 0 : index
      %45 = vector.load %arg6[%c0_29, %c0_30, %c0_31] : memref<1x128x1xf32, #tpu.memory_space<vmem>>, vector<1x128x1xf32>
      %46 = vector.shape_cast %45 : vector<1x128x1xf32> to vector<128x1xf32>
      %47 = vector.shape_cast %44 : vector<128x1xf32> to vector<1x128x1xf32>
      tpu.vector_store %arg6[%c0_29, %c0_30, %c0_31], %47 {strides = array<i32>} : memref<1x128x1xf32, #tpu.memory_space<vmem>>, vector<1x128x1xf32>,
    } else {
    }
    %c0 = arith.constant 0 : index
    %c0_1 = arith.constant 0 : index
    %3 = vector.load %arg2[%c0, %c0_1] : memref<128x16xf32, #tpu.memory_space<vmem>>, vector<128x16xf32>
    %c0_2 = arith.constant 0 : index
    %c0_3 = arith.constant 0 : index
    %4 = vector.load %arg3[%c0_2, %c0_3] : memref<128x16xf32, #tpu.memory_space<vmem>>, vector<128x16xf32>
    %c0_4 = arith.constant 0 : index
    %c0_5 = arith.constant 0 : index
    %5 = vector.load %arg4[%c0_4, %c0_5] : memref<128x16xf32, #tpu.memory_space<vmem>>, vector<128x16xf32>
    %6 = arith.subf %3, %4 : vector<128x16xf32>
    %7 = math.absf %6 : vector<128x16xf32>
    %cst = arith.constant 1.000000e+00 : f32
    %8 = vector.broadcast %cst : f32 to vector<128x16xf32>
    %9 = arith.cmpf olt, %7, %8 : vector<128x16xf32>
    %cst_6 = arith.constant 5.000000e-01 : f32
    %10 = vector.broadcast %cst_6 : f32 to vector<128x16xf32>
    %11 = arith.mulf %10, %6 : vector<128x16xf32>
    %12 = arith.mulf %11, %6 : vector<128x16xf32>
    %cst_7 = arith.constant 5.000000e-01 : f32
    %13 = vector.broadcast %cst_7 : f32 to vector<128x16xf32>
    %14 = arith.subf %7, %13 : vector<128x16xf32>
    %15 = arith.select %9, %12, %14 : vector<128x16xi1>, vector<128x16xf32>
    %16 = arith.mulf %4, %5 : vector<128x16xf32>
    %cst_8 = arith.constant dense<0.000000e+00> : vector<128xf32>
    %17 = vector.multi_reduction <add>, %16, %cst_8 [1] : vector<128x16xf32> to vector<128xf32>
    %18 = vector.shape_cast %17 : vector<128xf32> to vector<128x1xf32>
    %cst_9 = arith.constant dense<0.000000e+00> : vector<128xf32>
    %19 = vector.multi_reduction <add>, %5, %cst_9 [1] : vector<128x16xf32> to vector<128xf32>
    %20 = vector.shape_cast %19 : vector<128xf32> to vector<128x1xf32>
    %21 = arith.mulf %15, %5 : vector<128x16xf32>
    %cst_10 = arith.constant dense<0.000000e+00> : vector<128xf32>
    %22 = vector.multi_reduction <add>, %21, %cst_10 [1] : vector<128x16xf32> to vector<128xf32>
    %23 = vector.shape_cast %22 : vector<128xf32> to vector<128x1xf32>
    %cst_11 = arith.constant 9.99999997E-7 : f32
    %24 = vector.broadcast %cst_11 : f32 to vector<128x1xf32>
    %25 = arith.addf %20, %24 : vector<128x1xf32>
    %26 = arith.divf %18, %25 : vector<128x1xf32>
    %c0_12 = arith.constant 0 : index
    %c0_13 = arith.constant 0 : index
    %c0_14 = arith.constant 0 : index
    %27 = vector.load %arg5[%c0_12, %c0_13, %c0_14] : memref<1x128x1xf32, #tpu.memory_space<vmem>>, vector<1x128x1xf32>
    %28 = vector.shape_cast %27 : vector<1x128x1xf32> to vector<128x1xf32>
    %29 = arith.addf %28, %26 : vector<128x1xf32>
    %c0_15 = arith.constant 0 : index
    %c0_16 = arith.constant 0 : index
    %c0_17 = arith.constant 0 : index
    %30 = vector.load %arg5[%c0_15, %c0_16, %c0_17] : memref<1x128x1xf32, #tpu.memory_space<vmem>>, vector<1x128x1xf32>
    %31 = vector.shape_cast %30 : vector<1x128x1xf32> to vector<128x1xf32>
    %32 = vector.shape_cast %29 : vector<128x1xf32> to vector<1x128x1xf32>
    tpu.vector_store %arg5[%c0_15, %c0_16, %c0_17], %32 {strides = array<i32>} : memref<1x128x1xf32, #tpu.memory_space<vmem>>, vector<1x128x1xf32>,
    %c0_18 = arith.constant 0 : index
    %c0_19 = arith.constant 0 : index
    %c0_20 = arith.constant 0 : index
    %33 = vector.load %arg6[%c0_18, %c0_19, %c0_20] : memref<1x128x1xf32, #tpu.memory_space<vmem>>, vector<1x128x1xf32>
    %34 = vector.shape_cast %33 : vector<1x128x1xf32> to vector<128x1xf32>
    %35 = arith.mulf %26, %23 : vector<128x1xf32>
    %36 = arith.addf %34, %35 : vector<128x1xf32>
    %c0_21 = arith.constant 0 : index
    %c0_22 = arith.constant 0 : index
    %c0_23 = arith.constant 0 : index
    %37 = vector.load %arg6[%c0_21, %c0_22, %c0_23] : memref<1x128x1xf32, #tpu.memory_space<vmem>>, vector<1x128x1xf32>
    %38 = vector.shape_cast %37 : vector<1x128x1xf32> to vector<128x1xf32>
    %39 = vector.shape_cast %36 : vector<128x1xf32> to vector<1x128x1xf32>
    tpu.vector_store %arg6[%c0_21, %c0_22, %c0_23], %39 {strides = array<i32>} : memref<1x128x1xf32, #tpu.memory_space<vmem>>, vector<1x128x1xf32>,
    return
  }
  func.func @transform_0(%arg0: i32, %arg1: i32) -> (i32, i32) {
    %c1_i32 = arith.constant 1 : i32
    %0 = arith.muli %arg0, %c1_i32 : i32
    %1 = arith.addi %0, %arg1 : i32
    %c0_i32 = arith.constant 0 : i32
    %2 = arith.minsi %1, %c0_i32 : i32
    %c0_i32_0 = arith.constant 0 : i32
    %c0_i32_1 = arith.constant 0 : i32
    return %2, %c0_i32_0 : i32, i32
  }
  func.func @transform_1(%arg0: i32, %arg1: i32) -> (i32, i32) {
    %c1_i32 = arith.constant 1 : i32
    %0 = arith.muli %arg0, %c1_i32 : i32
    %1 = arith.addi %0, %arg1 : i32
    %c0_i32 = arith.constant 0 : i32
    %2 = arith.minsi %1, %c0_i32 : i32
    %c0_i32_0 = arith.constant 0 : i32
    %c0_i32_1 = arith.constant 0 : i32
    return %2, %c0_i32_0 : i32, i32
  }
  func.func @transform_2(%arg0: i32, %arg1: i32) -> (i32, i32) {
    %c1_i32 = arith.constant 1 : i32
    %0 = arith.muli %arg0, %c1_i32 : i32
    %1 = arith.addi %0, %arg1 : i32
    %c0_i32 = arith.constant 0 : i32
    %2 = arith.minsi %1, %c0_i32 : i32
    %c0_i32_0 = arith.constant 0 : i32
    %c0_i32_1 = arith.constant 0 : i32
    return %2, %c0_i32_0 : i32, i32
  }
  func.func @transform_3(%arg0: i32, %arg1: i32) -> (i32, i32, i32) {
    %c0_i32 = arith.constant 0 : i32
    %c0_i32_0 = arith.constant 0 : i32
    %c0_i32_1 = arith.constant 0 : i32
    return %arg0, %c0_i32, %c0_i32_0 : i32, i32, i32
  }
  func.func @transform_4(%arg0: i32, %arg1: i32) -> (i32, i32, i32) {
    %c0_i32 = arith.constant 0 : i32
    %c0_i32_0 = arith.constant 0 : i32
    %c0_i32_1 = arith.constant 0 : i32
    return %arg0, %c0_i32, %c0_i32_0 : i32, i32, i32
  }
}

</mosaic_0001>

<llo_original>
// kernel: masked_smooth_l1_loss_weighted.1
$region0: #{masked_smooth_l1_loss_weighted.1}
  #allocation0 [shape = 'u32[]', space=smem, size = 0x4, offset = 0x4, fixed_abs, tag = 'smem constant byte address 0x4 - core index']
  #allocation1 [shape = 'u32[72,128]{1,0:T(1,128)}', space=vmem, size = 0x9000, scoped, tag = 'internal scratch']
  %s0 = inlined_call_operand.hbm [shape: f32[128,16], index: 0, kind: input, shape index: {}]
  %s1 = inlined_call_operand.hbm [shape: f32[128,16], index: 1, kind: input, shape index: {}]
  %s2 = inlined_call_operand.hbm [shape: f32[128,16], index: 2, kind: input, shape index: {}]
  %s3 = inlined_call_operand.vmem [shape: f32[1,128,1], index: 3, kind: output, shape index: {0}]
  %s4 = inlined_call_operand.vmem [shape: f32[1,128,1], index: 4, kind: output, shape index: {1}]
  %5 = xla_tuple %s3, %s4
  %s6 = sld [smem:[#allocation0]]
  $region46: #{masked_smooth_l1_loss_weighted.1} parent=0
    _
  %s8 = ssub.s32 1, %s6
  %s9 = scalar_select 0, %s8, %s6
  $region1: #{masked_smooth_l1_loss_weighted.1} parent=0
    #allocation2 [shape = 'u8[65536]{0}', space=vmem, size = 0x10000, scoped, tag = 'input window, operand 0, single buffered']
    #allocation3 [shape = 's32[1]{0}', space=sflag, size = 0x4, scoped, tag = 'scoped memory for masked_smooth_l1_loss_weighted.1']
    #allocation4 [shape = 'u8[65536]{0}', space=vmem, size = 0x10000, scoped, tag = 'input window, operand 1, single buffered']
    #allocation5 [shape = 's32[1]{0}', space=sflag, size = 0x4, scoped, tag = 'scoped memory for masked_smooth_l1_loss_weighted.1']
    #allocation6 [shape = 'u8[65536]{0}', space=vmem, size = 0x10000, scoped, tag = 'input window, operand 2, single buffered']
    %10 = vsyncpa [#allocation3], 0
    %11 = vsyncpa [#allocation5], 0
    // Predicated region
    $region2: #{masked_smooth_l1_loss_weighted.1} parent=1 // pred_check
      _
    $region3: #{masked_smooth_l1_loss_weighted.1} parent=1 // pred_check_branch
      %13 = sbr.rel (0) target = $region5
    $region4: #{masked_smooth_l1_loss_weighted.1} parent=1 // pred_region
      %s14 = sadd.s32 0, 0
      %p15 = scmp.lt.s32.totalorder %s14, 0
      %s16 = scalar_select %p15, %s14, 0
      %s17 = smul.u32 16, %s16
      %19 = vsyncadd [#allocation3], 0
      %s20 = smul.addr %s17, 8
      %s21 = scalar_lea.hbm %s0, %s20
      %s22 = sshll.u32 %s21, 4
      %s23 = int_to_ptr.hbm [resolvable:$true] %s22
      %s24 = sshll.u32 [#allocation2], 4
      %s25 = int_to_ptr.vmem [resolvable:$true] %s24
      %30 = dma.hbm_to_vmem [thread:$0]  %s23, 2048, %s25, [#allocation3], 128, 128, 8
    $region5: #{masked_smooth_l1_loss_weighted.1} parent=1 // pred_fallthru
      _
    // Predicated region
    $region6: #{masked_smooth_l1_loss_weighted.1} parent=1 // pred_check
      _
    $region7: #{masked_smooth_l1_loss_weighted.1} parent=1 // pred_check_branch
      %32 = sbr.rel (0) target = $region9
    $region8: #{masked_smooth_l1_loss_weighted.1} parent=1 // pred_region
      %s33 = sadd.s32 0, 0
      %p34 = scmp.lt.s32.totalorder %s33, 0
      %s35 = scalar_select %p34, %s33, 0
      %s36 = smul.u32 16, %s35
      %38 = vsyncadd [#allocation5], 0
      %s39 = smul.addr %s36, 8
      %s40 = scalar_lea.hbm %s1, %s39
      %s41 = sshll.u32 %s40, 4
      %s42 = int_to_ptr.hbm [resolvable:$true] %s41
      %s43 = sshll.u32 [#allocation4], 4
      %s44 = int_to_ptr.vmem [resolvable:$true] %s43
      %49 = dma.hbm_to_vmem [thread:$0]  %s42, 2048, %s44, [#allocation5], 128, 128, 8
    $region9: #{masked_smooth_l1_loss_weighted.1} parent=1 // pred_fallthru
      _
    // Predicated region
    $region10: #{masked_smooth_l1_loss_weighted.1} parent=1 // pred_check
      _
    $region11: #{masked_smooth_l1_loss_weighted.1} parent=1 // pred_check_branch
      %51 = sbr.rel (0) target = $region13
    $region12: #{masked_smooth_l1_loss_weighted.1} parent=1 // pred_region
      %s52 = sadd.s32 0, 0
      %p53 = scmp.lt.s32.totalorder %s52, 0
      %s54 = scalar_select %p53, %s52, 0
      %s55 = smul.u32 16, %s54
      %57 = vsyncadd [#allocation5], 0
      %s58 = smul.addr %s55, 8
      %s59 = scalar_lea.hbm %s2, %s58
      %s60 = sshll.u32 %s59, 4
      %s61 = int_to_ptr.hbm [resolvable:$true] %s60
      %s62 = sshll.u32 [#allocation6], 4
      %s63 = int_to_ptr.vmem [resolvable:$true] %s62
      %68 = dma.hbm_to_vmem [thread:$0]  %s61, 2048, %s63, [#allocation5], 128, 128, 8
    $region13: #{masked_smooth_l1_loss_weighted.1} parent=1 // pred_fallthru
      _
    // Predicated region
    $region14: #{masked_smooth_l1_loss_weighted.1} parent=1 // pred_check
      _
    $region15: #{masked_smooth_l1_loss_weighted.1} parent=1 // pred_check_branch
      %70 = sbr.rel (0) target = $region17
    $region16: #{masked_smooth_l1_loss_weighted.1} parent=1 // pred_region
      %72 = dma.done [#allocation3], 2048
    $region17: #{masked_smooth_l1_loss_weighted.1} parent=1 // pred_fallthru
      _
    // Predicated region
    $region18: #{masked_smooth_l1_loss_weighted.1} parent=1 // pred_check
      _
    $region19: #{masked_smooth_l1_loss_weighted.1} parent=1 // pred_check_branch
      %74 = sbr.rel (0) target = $region21
    $region20: #{masked_smooth_l1_loss_weighted.1} parent=1 // pred_region
      %76 = dma.done [#allocation5], 2048
    $region21: #{masked_smooth_l1_loss_weighted.1} parent=1 // pred_fallthru
      _
    // Predicated region
    $region22: #{masked_smooth_l1_loss_weighted.1} parent=1 // pred_check
      _
    $region23: #{masked_smooth_l1_loss_weighted.1} parent=1 // pred_check_branch
      %78 = sbr.rel (0) target = $region25
    $region24: #{masked_smooth_l1_loss_weighted.1} parent=1 // pred_region
      %80 = dma.done [#allocation5], 2048
    $region25: #{masked_smooth_l1_loss_weighted.1} parent=1 // pred_fallthru
      _
    %s81 = sadd.s32 0, 0
    %p82 = scmp.lt.s32.totalorder %s81, 0
    %s83 = scalar_select %p82, %s81, 0
    %s84 = smul.u32 16, %s83
    %s85 = sadd.s32 0, 0
    %p86 = scmp.lt.s32.totalorder %s85, 0
    %s87 = scalar_select %p86, %s85, 0
    %s88 = smul.u32 16, %s87
    %s89 = sadd.s32 0, 0
    %p90 = scmp.lt.s32.totalorder %s89, 0
    %s91 = scalar_select %p90, %s89, 0
    %s92 = smul.u32 16, %s91
    %p93 = scmp.eq.s32.totalorder 0, 0
    // Predicated region
    $region26: #{masked_smooth_l1_loss_weighted.1} parent=1 // pred_check
      %p94 = pneg %p93
    $region27: #{masked_smooth_l1_loss_weighted.1} parent=1 // pred_check_branch
      %96 = sbr.rel (%p94) target = $region29
    $region28: #{masked_smooth_l1_loss_weighted.1} parent=1 // pred_region
      %vm97 = vcmask 7168
      %98 = vst.msk [vmem:[%s3] sm:$0xff] %vm97, 0.0
      %99 = vst.msk [vmem:[%s3 + $0x8] sm:$0xff] %vm97, 0.0
      %100 = vst.msk [vmem:[%s3 + $0x10] sm:$0xff] %vm97, 0.0
      %101 = vst.msk [vmem:[%s3 + $0x18] sm:$0xff] %vm97, 0.0
      %102 = vst.msk [vmem:[%s3 + $0x20] sm:$0xff] %vm97, 0.0
      %103 = vst.msk [vmem:[%s3 + $0x28] sm:$0xff] %vm97, 0.0
      %104 = vst.msk [vmem:[%s3 + $0x30] sm:$0xff] %vm97, 0.0
      %105 = vst.msk [vmem:[%s3 + $0x38] sm:$0xff] %vm97, 0.0
      %106 = vst.msk [vmem:[%s3 + $0x40] sm:$0xff] %vm97, 0.0
      %107 = vst.msk [vmem:[%s3 + $0x48] sm:$0xff] %vm97, 0.0
      %108 = vst.msk [vmem:[%s3 + $0x50] sm:$0xff] %vm97, 0.0
      %109 = vst.msk [vmem:[%s3 + $0x58] sm:$0xff] %vm97, 0.0
      %110 = vst.msk [vmem:[%s3 + $0x60] sm:$0xff] %vm97, 0.0
      %111 = vst.msk [vmem:[%s3 + $0x68] sm:$0xff] %vm97, 0.0
      %112 = vst.msk [vmem:[%s3 + $0x70] sm:$0xff] %vm97, 0.0
      %113 = vst.msk [vmem:[%s3 + $0x78] sm:$0xff] %vm97, 0.0
      %114 = vst.msk [vmem:[%s4] sm:$0xff] %vm97, 0.0
      %115 = vst.msk [vmem:[%s4 + $0x8] sm:$0xff] %vm97, 0.0
      %116 = vst.msk [vmem:[%s4 + $0x10] sm:$0xff] %vm97, 0.0
      %117 = vst.msk [vmem:[%s4 + $0x18] sm:$0xff] %vm97, 0.0
      %118 = vst.msk [vmem:[%s4 + $0x20] sm:$0xff] %vm97, 0.0
      %119 = vst.msk [vmem:[%s4 + $0x28] sm:$0xff] %vm97, 0.0
      %120 = vst.msk [vmem:[%s4 + $0x30] sm:$0xff] %vm97, 0.0
      %121 = vst.msk [vmem:[%s4 + $0x38] sm:$0xff] %vm97, 0.0
      %122 = vst.msk [vmem:[%s4 + $0x40] sm:$0xff] %vm97, 0.0
      %123 = vst.msk [vmem:[%s4 + $0x48] sm:$0xff] %vm97, 0.0
      %124 = vst.msk [vmem:[%s4 + $0x50] sm:$0xff] %vm97, 0.0
      %125 = vst.msk [vmem:[%s4 + $0x58] sm:$0xff] %vm97, 0.0
      %126 = vst.msk [vmem:[%s4 + $0x60] sm:$0xff] %vm97, 0.0
      %127 = vst.msk [vmem:[%s4 + $0x68] sm:$0xff] %vm97, 0.0
      %128 = vst.msk [vmem:[%s4 + $0x70] sm:$0xff] %vm97, 0.0
      %129 = vst.msk [vmem:[%s4 + $0x78] sm:$0xff] %vm97, 0.0
    $region29: #{masked_smooth_l1_loss_weighted.1} parent=1 // pred_fallthru
      _
    %v130 = vld [vmem:[#allocation2] sm:$0xff]
    %v131 = vld [vmem:[#allocation2 + $0x8] sm:$0xff]
    %v132 = vld [vmem:[#allocation2 + $0x10] sm:$0xff]
    %v133 = vld [vmem:[#allocation2 + $0x18] sm:$0xff]
    %v134 = vld [vmem:[#allocation2 + $0x20] sm:$0xff]
    %v135 = vld [vmem:[#allocation2 + $0x28] sm:$0xff]
    %v136 = vld [vmem:[#allocation2 + $0x30] sm:$0xff]
    %v137 = vld [vmem:[#allocation2 + $0x38] sm:$0xff]
    %v138 = vld [vmem:[#allocation2 + $0x40] sm:$0xff]
    %v139 = vld [vmem:[#allocation2 + $0x48] sm:$0xff]
    %v140 = vld [vmem:[#allocation2 + $0x50] sm:$0xff]
    %v141 = vld [vmem:[#allocation2 + $0x58] sm:$0xff]
    %v142 = vld [vmem:[#allocation2 + $0x60] sm:$0xff]
    %v143 = vld [vmem:[#allocation2 + $0x68] sm:$0xff]
    %v144 = vld [vmem:[#allocation2 + $0x70] sm:$0xff]
    %v145 = vld [vmem:[#allocation2 + $0x78] sm:$0xff]
    %v146 = vld [vmem:[#allocation4] sm:$0xff]
    %v147 = vld [vmem:[#allocation4 + $0x8] sm:$0xff]
    %v148 = vld [vmem:[#allocation4 + $0x10] sm:$0xff]
    %v149 = vld [vmem:[#allocation4 + $0x18] sm:$0xff]
    %v150 = vld [vmem:[#allocation4 + $0x20] sm:$0xff]
    %v151 = vld [vmem:[#allocation4 + $0x28] sm:$0xff]
    %v152 = vld [vmem:[#allocation4 + $0x30] sm:$0xff]
    %v153 = vld [vmem:[#allocation4 + $0x38] sm:$0xff]
    %v154 = vld [vmem:[#allocation4 + $0x40] sm:$0xff]
    %v155 = vld [vmem:[#allocation4 + $0x48] sm:$0xff]
    %v156 = vld [vmem:[#allocation4 + $0x50] sm:$0xff]
    %v157 = vld [vmem:[#allocation4 + $0x58] sm:$0xff]
    %v158 = vld [vmem:[#allocation4 + $0x60] sm:$0xff]
    %v159 = vld [vmem:[#allocation4 + $0x68] sm:$0xff]
    %v160 = vld [vmem:[#allocation4 + $0x70] sm:$0xff]
    %v161 = vld [vmem:[#allocation4 + $0x78] sm:$0xff]
    %v162 = vld [vmem:[#allocation6] sm:$0xff]
    %v163 = vld [vmem:[#allocation6 + $0x8] sm:$0xff]
    %v164 = vld [vmem:[#allocation6 + $0x10] sm:$0xff]
    %v165 = vld [vmem:[#allocation6 + $0x18] sm:$0xff]
    %v166 = vld [vmem:[#allocation6 + $0x20] sm:$0xff]
    %v167 = vld [vmem:[#allocation6 + $0x28] sm:$0xff]
    %v168 = vld [vmem:[#allocation6 + $0x30] sm:$0xff]
    %v169 = vld [vmem:[#allocation6 + $0x38] sm:$0xff]
    %v170 = vld [vmem:[#allocation6 + $0x40] sm:$0xff]
    %v171 = vld [vmem:[#allocation6 + $0x48] sm:$0xff]
    %v172 = vld [vmem:[#allocation6 + $0x50] sm:$0xff]
    %v173 = vld [vmem:[#allocation6 + $0x58] sm:$0xff]
    %v174 = vld [vmem:[#allocation6 + $0x60] sm:$0xff]
    %v175 = vld [vmem:[#allocation6 + $0x68] sm:$0xff]
    %v176 = vld [vmem:[#allocation6 + $0x70] sm:$0xff]
    %v177 = vld [vmem:[#allocation6 + $0x78] sm:$0xff]
    %v178 = vsub.f32 %v130, %v146
    %v179 = vsub.f32 %v131, %v147
    %v180 = vsub.f32 %v132, %v148
    %v181 = vsub.f32 %v133, %v149
    %v182 = vsub.f32 %v134, %v150
    %v183 = vsub.f32 %v135, %v151
    %v184 = vsub.f32 %v136, %v152
    %v185 = vsub.f32 %v137, %v153
    %v186 = vsub.f32 %v138, %v154
    %v187 = vsub.f32 %v139, %v155
    %v188 = vsub.f32 %v140, %v156
    %v189 = vsub.f32 %v141, %v157
    %v190 = vsub.f32 %v142, %v158
    %v191 = vsub.f32 %v143, %v159
    %v192 = vsub.f32 %v144, %v160
    %v193 = vsub.f32 %v145, %v161
    %v194 = vand.u32 2147483647, %v178
    %v195 = vand.u32 2147483647, %v179
    %v196 = vand.u32 2147483647, %v180
    %v197 = vand.u32 2147483647, %v181
    %v198 = vand.u32 2147483647, %v182
    %v199 = vand.u32 2147483647, %v183
    %v200 = vand.u32 2147483647, %v184
    %v201 = vand.u32 2147483647, %v185
    %v202 = vand.u32 2147483647, %v186
    %v203 = vand.u32 2147483647, %v187
    %v204 = vand.u32 2147483647, %v188
    %v205 = vand.u32 2147483647, %v189
    %v206 = vand.u32 2147483647, %v190
    %v207 = vand.u32 2147483647, %v191
    %v208 = vand.u32 2147483647, %v192
    %v209 = vand.u32 2147483647, %v193
    %vm210 = vcmp.lt.f32.partialorder %v194, 1.0
    %vm211 = vcmp.lt.f32.partialorder %v195, 1.0
    %vm212 = vcmp.lt.f32.partialorder %v196, 1.0
    %vm213 = vcmp.lt.f32.partialorder %v197, 1.0
    %vm214 = vcmp.lt.f32.partialorder %v198, 1.0
    %vm215 = vcmp.lt.f32.partialorder %v199, 1.0
    %vm216 = vcmp.lt.f32.partialorder %v200, 1.0
    %vm217 = vcmp.lt.f32.partialorder %v201, 1.0
    %vm218 = vcmp.lt.f32.partialorder %v202, 1.0
    %vm219 = vcmp.lt.f32.partialorder %v203, 1.0
    %vm220 = vcmp.lt.f32.partialorder %v204, 1.0
    %vm221 = vcmp.lt.f32.partialorder %v205, 1.0
    %vm222 = vcmp.lt.f32.partialorder %v206, 1.0
    %vm223 = vcmp.lt.f32.partialorder %v207, 1.0
    %vm224 = vcmp.lt.f32.partialorder %v208, 1.0
    %vm225 = vcmp.lt.f32.partialorder %v209, 1.0
    %v226 = vmul.f32 %v178, 0.5
    %v227 = vmul.f32 %v179, 0.5
    %v228 = vmul.f32 %v180, 0.5
    %v229 = vmul.f32 %v181, 0.5
    %v230 = vmul.f32 %v182, 0.5
    %v231 = vmul.f32 %v183, 0.5
    %v232 = vmul.f32 %v184, 0.5
    %v233 = vmul.f32 %v185, 0.5
    %v234 = vmul.f32 %v186, 0.5
    %v235 = vmul.f32 %v187, 0.5
    %v236 = vmul.f32 %v188, 0.5
    %v237 = vmul.f32 %v189, 0.5
    %v238 = vmul.f32 %v190, 0.5
    %v239 = vmul.f32 %v191, 0.5
    %v240 = vmul.f32 %v192, 0.5
    %v241 = vmul.f32 %v193, 0.5
    %v242 = vmul.f32 %v226, %v178
    %v243 = vmul.f32 %v227, %v179
    %v244 = vmul.f32 %v228, %v180
    %v245 = vmul.f32 %v229, %v181
    %v246 = vmul.f32 %v230, %v182
    %v247 = vmul.f32 %v231, %v183
    %v248 = vmul.f32 %v232, %v184
    %v249 = vmul.f32 %v233, %v185
    %v250 = vmul.f32 %v234, %v186
    %v251 = vmul.f32 %v235, %v187
    %v252 = vmul.f32 %v236, %v188
    %v253 = vmul.f32 %v237, %v189
    %v254 = vmul.f32 %v238, %v190
    %v255 = vmul.f32 %v239, %v191
    %v256 = vmul.f32 %v240, %v192
    %v257 = vmul.f32 %v241, %v193
    %v258 = vsub.f32 %v194, 0.5
    %v259 = vsub.f32 %v195, 0.5
    %v260 = vsub.f32 %v196, 0.5
    %v261 = vsub.f32 %v197, 0.5
    %v262 = vsub.f32 %v198, 0.5
    %v263 = vsub.f32 %v199, 0.5
    %v264 = vsub.f32 %v200, 0.5
    %v265 = vsub.f32 %v201, 0.5
    %v266 = vsub.f32 %v202, 0.5
    %v267 = vsub.f32 %v203, 0.5
    %v268 = vsub.f32 %v204, 0.5
    %v269 = vsub.f32 %v205, 0.5
    %v270 = vsub.f32 %v206, 0.5
    %v271 = vsub.f32 %v207, 0.5
    %v272 = vsub.f32 %v208, 0.5
    %v273 = vsub.f32 %v209, 0.5
    %v274 = vsel %vm210, %v242, %v258
    %v275 = vsel %vm211, %v243, %v259
    %v276 = vsel %vm212, %v244, %v260
    %v277 = vsel %vm213, %v245, %v261
    %v278 = vsel %vm214, %v246, %v262
    %v279 = vsel %vm215, %v247, %v263
    %v280 = vsel %vm216, %v248, %v264
    %v281 = vsel %vm217, %v249, %v265
    %v282 = vsel %vm218, %v250, %v266
    %v283 = vsel %vm219, %v251, %v267
    %v284 = vsel %vm220, %v252, %v268
    %v285 = vsel %vm221, %v253, %v269
    %v286 = vsel %vm222, %v254, %v270
    %v287 = vsel %vm223, %v255, %v271
    %v288 = vsel %vm224, %v256, %v272
    %v289 = vsel %vm225, %v257, %v273
    %v290 = vmul.f32 %v146, %v162
    %v291 = vmul.f32 %v147, %v163
    %v292 = vmul.f32 %v148, %v164
    %v293 = vmul.f32 %v149, %v165
    %v294 = vmul.f32 %v150, %v166
    %v295 = vmul.f32 %v151, %v167
    %v296 = vmul.f32 %v152, %v168
    %v297 = vmul.f32 %v153, %v169
    %v298 = vmul.f32 %v154, %v170
    %v299 = vmul.f32 %v155, %v171
    %v300 = vmul.f32 %v156, %v172
    %v301 = vmul.f32 %v157, %v173
    %v302 = vmul.f32 %v158, %v174
    %v303 = vmul.f32 %v159, %v175
    %v304 = vmul.f32 %v160, %v176
    %v305 = vmul.f32 %v161, %v177
    %vm306 = vcmask 130048
    %v307 = vsel %vm306, %v290, 0.0
    %308 = vadd.xlane.f32.xlu0 %v307
    %v309 = vpop.xlane.xlu0 %308
    %v310 = vsel %vm306, %v291, 0.0
    %311 = vadd.xlane.f32.xlu0 %v310
    %v312 = vpop.xlane.xlu0 %311
    %v313 = vsel %vm306, %v292, 0.0
    %314 = vadd.xlane.f32.xlu0 %v313
    %v315 = vpop.xlane.xlu0 %314
    %v316 = vsel %vm306, %v293, 0.0
    %317 = vadd.xlane.f32.xlu0 %v316
    %v318 = vpop.xlane.xlu0 %317
    %v319 = vsel %vm306, %v294, 0.0
    %320 = vadd.xlane.f32.xlu0 %v319
    %v321 = vpop.xlane.xlu0 %320
    %v322 = vsel %vm306, %v295, 0.0
    %323 = vadd.xlane.f32.xlu0 %v322
    %v324 = vpop.xlane.xlu0 %323
    %v325 = vsel %vm306, %v296, 0.0
    %326 = vadd.xlane.f32.xlu0 %v325
    %v327 = vpop.xlane.xlu0 %326
    %v328 = vsel %vm306, %v297, 0.0
    %329 = vadd.xlane.f32.xlu0 %v328
    %v330 = vpop.xlane.xlu0 %329
    %v331 = vsel %vm306, %v298, 0.0
    %332 = vadd.xlane.f32.xlu0 %v331
    %v333 = vpop.xlane.xlu0 %332
    %v334 = vsel %vm306, %v299, 0.0
    %335 = vadd.xlane.f32.xlu0 %v334
    %v336 = vpop.xlane.xlu0 %335
    %v337 = vsel %vm306, %v300, 0.0
    %338 = vadd.xlane.f32.xlu0 %v337
    %v339 = vpop.xlane.xlu0 %338
    %v340 = vsel %vm306, %v301, 0.0
    %341 = vadd.xlane.f32.xlu0 %v340
    %v342 = vpop.xlane.xlu0 %341
    %v343 = vsel %vm306, %v302, 0.0
    %344 = vadd.xlane.f32.xlu0 %v343
    %v345 = vpop.xlane.xlu0 %344
    %v346 = vsel %vm306, %v303, 0.0
    %347 = vadd.xlane.f32.xlu0 %v346
    %v348 = vpop.xlane.xlu0 %347
    %v349 = vsel %vm306, %v304, 0.0
    %350 = vadd.xlane.f32.xlu0 %v349
    %v351 = vpop.xlane.xlu0 %350
    %v352 = vsel %vm306, %v305, 0.0
    %353 = vadd.xlane.f32.xlu0 %v352
    %v354 = vpop.xlane.xlu0 %353
    %v355 = vsel %vm306, %v162, 0.0
    %356 = vadd.xlane.f32.xlu0 %v355
    %v357 = vpop.xlane.xlu0 %356
    %v358 = vsel %vm306, %v163, 0.0
    %359 = vadd.xlane.f32.xlu0 %v358
    %v360 = vpop.xlane.xlu0 %359
    %v361 = vsel %vm306, %v164, 0.0
    %362 = vadd.xlane.f32.xlu0 %v361
    %v363 = vpop.xlane.xlu0 %362
    %v364 = vsel %vm306, %v165, 0.0
    %365 = vadd.xlane.f32.xlu0 %v364
    %v366 = vpop.xlane.xlu0 %365
    %v367 = vsel %vm306, %v166, 0.0
    %368 = vadd.xlane.f32.xlu0 %v367
    %v369 = vpop.xlane.xlu0 %368
    %v370 = vsel %vm306, %v167, 0.0
    %371 = vadd.xlane.f32.xlu0 %v370
    %v372 = vpop.xlane.xlu0 %371
    %v373 = vsel %vm306, %v168, 0.0
    %374 = vadd.xlane.f32.xlu0 %v373
    %v375 = vpop.xlane.xlu0 %374
    %v376 = vsel %vm306, %v169, 0.0
    %377 = vadd.xlane.f32.xlu0 %v376
    %v378 = vpop.xlane.xlu0 %377
    %v379 = vsel %vm306, %v170, 0.0
    %380 = vadd.xlane.f32.xlu0 %v379
    %v381 = vpop.xlane.xlu0 %380
    %v382 = vsel %vm306, %v171, 0.0
    %383 = vadd.xlane.f32.xlu0 %v382
    %v384 = vpop.xlane.xlu0 %383
    %v385 = vsel %vm306, %v172, 0.0
    %386 = vadd.xlane.f32.xlu0 %v385
    %v387 = vpop.xlane.xlu0 %386
    %v388 = vsel %vm306, %v173, 0.0
    %389 = vadd.xlane.f32.xlu0 %v388
    %v390 = vpop.xlane.xlu0 %389
    %v391 = vsel %vm306, %v174, 0.0
    %392 = vadd.xlane.f32.xlu0 %v391
    %v393 = vpop.xlane.xlu0 %392
    %v394 = vsel %vm306, %v175, 0.0
    %395 = vadd.xlane.f32.xlu0 %v394
    %v396 = vpop.xlane.xlu0 %395
    %v397 = vsel %vm306, %v176, 0.0
    %398 = vadd.xlane.f32.xlu0 %v397
    %v399 = vpop.xlane.xlu0 %398
    %v400 = vsel %vm306, %v177, 0.0
    %401 = vadd.xlane.f32.xlu0 %v400
    %v402 = vpop.xlane.xlu0 %401
    %v403 = vmul.f32 %v274, %v162
    %v404 = vmul.f32 %v275, %v163
    %v405 = vmul.f32 %v276, %v164
    %v406 = vmul.f32 %v277, %v165
    %v407 = vmul.f32 %v278, %v166
    %v408 = vmul.f32 %v279, %v167
    %v409 = vmul.f32 %v280, %v168
    %v410 = vmul.f32 %v281, %v169
    %v411 = vmul.f32 %v282, %v170
    %v412 = vmul.f32 %v283, %v171
    %v413 = vmul.f32 %v284, %v172
    %v414 = vmul.f32 %v285, %v173
    %v415 = vmul.f32 %v286, %v174
    %v416 = vmul.f32 %v287, %v175
    %v417 = vmul.f32 %v288, %v176
    %v418 = vmul.f32 %v289, %v177
    %v419 = vsel %vm306, %v403, 0.0
    %420 = vadd.xlane.f32.xlu0 %v419
    %v421 = vpop.xlane.xlu0 %420
    %v422 = vsel %vm306, %v404, 0.0
    %423 = vadd.xlane.f32.xlu0 %v422
    %v424 = vpop.xlane.xlu0 %423
    %v425 = vsel %vm306, %v405, 0.0
    %426 = vadd.xlane.f32.xlu0 %v425
    %v427 = vpop.xlane.xlu0 %426
    %v428 = vsel %vm306, %v406, 0.0
    %429 = vadd.xlane.f32.xlu0 %v428
    %v430 = vpop.xlane.xlu0 %429
    %v431 = vsel %vm306, %v407, 0.0
    %432 = vadd.xlane.f32.xlu0 %v431
    %v433 = vpop.xlane.xlu0 %432
    %v434 = vsel %vm306, %v408, 0.0
    %435 = vadd.xlane.f32.xlu0 %v434
    %v436 = vpop.xlane.xlu0 %435
    %v437 = vsel %vm306, %v409, 0.0
    %438 = vadd.xlane.f32.xlu0 %v437
    %v439 = vpop.xlane.xlu0 %438
    %v440 = vsel %vm306, %v410, 0.0
    %441 = vadd.xlane.f32.xlu0 %v440
    %v442 = vpop.xlane.xlu0 %441
    %v443 = vsel %vm306, %v411, 0.0
    %444 = vadd.xlane.f32.xlu0 %v443
    %v445 = vpop.xlane.xlu0 %444
    %v446 = vsel %vm306, %v412, 0.0
    %447 = vadd.xlane.f32.xlu0 %v446
    %v448 = vpop.xlane.xlu0 %447
    %v449 = vsel %vm306, %v413, 0.0
    %450 = vadd.xlane.f32.xlu0 %v449
    %v451 = vpop.xlane.xlu0 %450
    %v452 = vsel %vm306, %v414, 0.0
    %453 = vadd.xlane.f32.xlu0 %v452
    %v454 = vpop.xlane.xlu0 %453
    %v455 = vsel %vm306, %v415, 0.0
    %456 = vadd.xlane.f32.xlu0 %v455
    %v457 = vpop.xlane.xlu0 %456
    %v458 = vsel %vm306, %v416, 0.0
    %459 = vadd.xlane.f32.xlu0 %v458
    %v460 = vpop.xlane.xlu0 %459
    %v461 = vsel %vm306, %v417, 0.0
    %462 = vadd.xlane.f32.xlu0 %v461
    %v463 = vpop.xlane.xlu0 %462
    %v464 = vsel %vm306, %v418, 0.0
    %465 = vadd.xlane.f32.xlu0 %v464
    %v466 = vpop.xlane.xlu0 %465
    %v467 = vadd.f32 %v357, 1e-06
    %v468 = vadd.f32 %v360, 1e-06
    %v469 = vadd.f32 %v363, 1e-06
    %v470 = vadd.f32 %v366, 1e-06
    %v471 = vadd.f32 %v369, 1e-06
    %v472 = vadd.f32 %v372, 1e-06
    %v473 = vadd.f32 %v375, 1e-06
    %v474 = vadd.f32 %v378, 1e-06
    %v475 = vadd.f32 %v381, 1e-06
    %v476 = vadd.f32 %v384, 1e-06
    %v477 = vadd.f32 %v387, 1e-06
    %v478 = vadd.f32 %v390, 1e-06
    %v479 = vadd.f32 %v393, 1e-06
    %v480 = vadd.f32 %v396, 1e-06
    %v481 = vadd.f32 %v399, 1e-06
    %v482 = vadd.f32 %v402, 1e-06
    %v483 = vrcp.pop %v467
    %v484 = vmul.f32 %v467, %v483
    %v485 = vsub.f32 1.0, %v484
    %v486 = vmul.f32 %v483, %v485
    %v487 = vadd.f32 %v483, %v486
    %vm488 = vweird.f32 %v467
    %vm489 = vweird.f32 %v483
    %vm490 = vmor %vm488, %vm489
    %v491 = vsel %vm490, %v483, %v487
    %v492 = vand.u32 2147483647, %v467
    %vm493 = vcmp.eq.f32.partialorder %v492, 8.507059e+37
    %v494 = vand.u32 %v467, 2147483648
    %v495 = vor.u32 1.1754944e-38, %v494
    %v496 = vsel %vm493, %v495, %v491
    %v497 = vmul.f32 %v309, %v496
    %v498 = vrcp.pop %v468
    %v499 = vmul.f32 %v468, %v498
    %v500 = vsub.f32 1.0, %v499
    %v501 = vmul.f32 %v498, %v500
    %v502 = vadd.f32 %v498, %v501
    %vm503 = vweird.f32 %v468
    %vm504 = vweird.f32 %v498
    %vm505 = vmor %vm503, %vm504
    %v506 = vsel %vm505, %v498, %v502
    %v507 = vand.u32 2147483647, %v468
    %vm508 = vcmp.eq.f32.partialorder %v507, 8.507059e+37
    %v509 = vand.u32 %v468, 2147483648
    %v510 = vor.u32 1.1754944e-38, %v509
    %v511 = vsel %vm508, %v510, %v506
    %v512 = vmul.f32 %v312, %v511
    %v513 = vrcp.pop %v469
    %v514 = vmul.f32 %v469, %v513
    %v515 = vsub.f32 1.0, %v514
    %v516 = vmul.f32 %v513, %v515
    %v517 = vadd.f32 %v513, %v516
    %vm518 = vweird.f32 %v469
    %vm519 = vweird.f32 %v513
    %vm520 = vmor %vm518, %vm519
    %v521 = vsel %vm520, %v513, %v517
    %v522 = vand.u32 2147483647, %v469
    %vm523 = vcmp.eq.f32.partialorder %v522, 8.507059e+37
    %v524 = vand.u32 %v469, 2147483648
    %v525 = vor.u32 1.1754944e-38, %v524
    %v526 = vsel %vm523, %v525, %v521
    %v527 = vmul.f32 %v315, %v526
    %v528 = vrcp.pop %v470
    %v529 = vmul.f32 %v470, %v528
    %v530 = vsub.f32 1.0, %v529
    %v531 = vmul.f32 %v528, %v530
    %v532 = vadd.f32 %v528, %v531
    %vm533 = vweird.f32 %v470
    %vm534 = vweird.f32 %v528
    %vm535 = vmor %vm533, %vm534
    %v536 = vsel %vm535, %v528, %v532
    %v537 = vand.u32 2147483647, %v470
    %vm538 = vcmp.eq.f32.partialorder %v537, 8.507059e+37
    %v539 = vand.u32 %v470, 2147483648
    %v540 = vor.u32 1.1754944e-38, %v539
    %v541 = vsel %vm538, %v540, %v536
    %v542 = vmul.f32 %v318, %v541
    %v543 = vrcp.pop %v471
    %v544 = vmul.f32 %v471, %v543
    %v545 = vsub.f32 1.0, %v544
    %v546 = vmul.f32 %v543, %v545
    %v547 = vadd.f32 %v543, %v546
    %vm548 = vweird.f32 %v471
    %vm549 = vweird.f32 %v543
    %vm550 = vmor %vm548, %vm549
    %v551 = vsel %vm550, %v543, %v547
    %v552 = vand.u32 2147483647, %v471
    %vm553 = vcmp.eq.f32.partialorder %v552, 8.507059e+37
    %v554 = vand.u32 %v471, 2147483648
    %v555 = vor.u32 1.1754944e-38, %v554
    %v556 = vsel %vm553, %v555, %v551
    %v557 = vmul.f32 %v321, %v556
    %v558 = vrcp.pop %v472
    %v559 = vmul.f32 %v472, %v558
    %v560 = vsub.f32 1.0, %v559
    %v561 = vmul.f32 %v558, %v560
    %v562 = vadd.f32 %v558, %v561
    %vm563 = vweird.f32 %v472
    %vm564 = vweird.f32 %v558
    %vm565 = vmor %vm563, %vm564
    %v566 = vsel %vm565, %v558, %v562
    %v567 = vand.u32 2147483647, %v472
    %vm568 = vcmp.eq.f32.partialorder %v567, 8.507059e+37
    %v569 = vand.u32 %v472, 2147483648
    %v570 = vor.u32 1.1754944e-38, %v569
    %v571 = vsel %vm568, %v570, %v566
    %v572 = vmul.f32 %v324, %v571
    %v573 = vrcp.pop %v473
    %v574 = vmul.f32 %v473, %v573
    %v575 = vsub.f32 1.0, %v574
    %v576 = vmul.f32 %v573, %v575
    %v577 = vadd.f32 %v573, %v576
    %vm578 = vweird.f32 %v473
    %vm579 = vweird.f32 %v573
    %vm580 = vmor %vm578, %vm579
    %v581 = vsel %vm580, %v573, %v577
    %v582 = vand.u32 2147483647, %v473
    %vm583 = vcmp.eq.f32.partialorder %v582, 8.507059e+37
    %v584 = vand.u32 %v473, 2147483648
    %v585 = vor.u32 1.1754944e-38, %v584
    %v586 = vsel %vm583, %v585, %v581
    %v587 = vmul.f32 %v327, %v586
    %v588 = vrcp.pop %v474
    %v589 = vmul.f32 %v474, %v588
    %v590 = vsub.f32 1.0, %v589
    %v591 = vmul.f32 %v588, %v590
    %v592 = vadd.f32 %v588, %v591
    %vm593 = vweird.f32 %v474
    %vm594 = vweird.f32 %v588
    %vm595 = vmor %vm593, %vm594
    %v596 = vsel %vm595, %v588, %v592
    %v597 = vand.u32 2147483647, %v474
    %vm598 = vcmp.eq.f32.partialorder %v597, 8.507059e+37
    %v599 = vand.u32 %v474, 2147483648
    %v600 = vor.u32 1.1754944e-38, %v599
    %v601 = vsel %vm598, %v600, %v596
    %v602 = vmul.f32 %v330, %v601
    %v603 = vrcp.pop %v475
    %v604 = vmul.f32 %v475, %v603
    %v605 = vsub.f32 1.0, %v604
    %v606 = vmul.f32 %v603, %v605
    %v607 = vadd.f32 %v603, %v606
    %vm608 = vweird.f32 %v475
    %vm609 = vweird.f32 %v603
    %vm610 = vmor %vm608, %vm609
    %v611 = vsel %vm610, %v603, %v607
    %v612 = vand.u32 2147483647, %v475
    %vm613 = vcmp.eq.f32.partialorder %v612, 8.507059e+37
    %v614 = vand.u32 %v475, 2147483648
    %v615 = vor.u32 1.1754944e-38, %v614
    %v616 = vsel %vm613, %v615, %v611
    %v617 = vmul.f32 %v333, %v616
    %v618 = vrcp.pop %v476
    %v619 = vmul.f32 %v476, %v618
    %v620 = vsub.f32 1.0, %v619
    %v621 = vmul.f32 %v618, %v620
    %v622 = vadd.f32 %v618, %v621
    %vm623 = vweird.f32 %v476
    %vm624 = vweird.f32 %v618
    %vm625 = vmor %vm623, %vm624
    %v626 = vsel %vm625, %v618, %v622
    %v627 = vand.u32 2147483647, %v476
    %vm628 = vcmp.eq.f32.partialorder %v627, 8.507059e+37
    %v629 = vand.u32 %v476, 2147483648
    %v630 = vor.u32 1.1754944e-38, %v629
    %v631 = vsel %vm628, %v630, %v626
    %v632 = vmul.f32 %v336, %v631
    %v633 = vrcp.pop %v477
    %v634 = vmul.f32 %v477, %v633
    %v635 = vsub.f32 1.0, %v634
    %v636 = vmul.f32 %v633, %v635
    %v637 = vadd.f32 %v633, %v636
    %vm638 = vweird.f32 %v477
    %vm639 = vweird.f32 %v633
    %vm640 = vmor %vm638, %vm639
    %v641 = vsel %vm640, %v633, %v637
    %v642 = vand.u32 2147483647, %v477
    %vm643 = vcmp.eq.f32.partialorder %v642, 8.507059e+37
    %v644 = vand.u32 %v477, 2147483648
    %v645 = vor.u32 1.1754944e-38, %v644
    %v646 = vsel %vm643, %v645, %v641
    %v647 = vmul.f32 %v339, %v646
    %v648 = vrcp.pop %v478
    %v649 = vmul.f32 %v478, %v648
    %v650 = vsub.f32 1.0, %v649
    %v651 = vmul.f32 %v648, %v650
    %v652 = vadd.f32 %v648, %v651
    %vm653 = vweird.f32 %v478
    %vm654 = vweird.f32 %v648
    %vm655 = vmor %vm653, %vm654
    %v656 = vsel %vm655, %v648, %v652
    %v657 = vand.u32 2147483647, %v478
    %vm658 = vcmp.eq.f32.partialorder %v657, 8.507059e+37
    %v659 = vand.u32 %v478, 2147483648
    %v660 = vor.u32 1.1754944e-38, %v659
    %v661 = vsel %vm658, %v660, %v656
    %v662 = vmul.f32 %v342, %v661
    %v663 = vrcp.pop %v479
    %v664 = vmul.f32 %v479, %v663
    %v665 = vsub.f32 1.0, %v664
    %v666 = vmul.f32 %v663, %v665
    %v667 = vadd.f32 %v663, %v666
    %vm668 = vweird.f32 %v479
    %vm669 = vweird.f32 %v663
    %vm670 = vmor %vm668, %vm669
    %v671 = vsel %vm670, %v663, %v667
    %v672 = vand.u32 2147483647, %v479
    %vm673 = vcmp.eq.f32.partialorder %v672, 8.507059e+37
    %v674 = vand.u32 %v479, 2147483648
    %v675 = vor.u32 1.1754944e-38, %v674
    %v676 = vsel %vm673, %v675, %v671
    %v677 = vmul.f32 %v345, %v676
    %v678 = vrcp.pop %v480
    %v679 = vmul.f32 %v480, %v678
    %v680 = vsub.f32 1.0, %v679
    %v681 = vmul.f32 %v678, %v680
    %v682 = vadd.f32 %v678, %v681
    %vm683 = vweird.f32 %v480
    %vm684 = vweird.f32 %v678
    %vm685 = vmor %vm683, %vm684
    %v686 = vsel %vm685, %v678, %v682
    %v687 = vand.u32 2147483647, %v480
    %vm688 = vcmp.eq.f32.partialorder %v687, 8.507059e+37
    %v689 = vand.u32 %v480, 2147483648
    %v690 = vor.u32 1.1754944e-38, %v689
    %v691 = vsel %vm688, %v690, %v686
    %v692 = vmul.f32 %v348, %v691
    %v693 = vrcp.pop %v481
    %v694 = vmul.f32 %v481, %v693
    %v695 = vsub.f32 1.0, %v694
    %v696 = vmul.f32 %v693, %v695
    %v697 = vadd.f32 %v693, %v696
    %vm698 = vweird.f32 %v481
    %vm699 = vweird.f32 %v693
    %vm700 = vmor %vm698, %vm699
    %v701 = vsel %vm700, %v693, %v697
    %v702 = vand.u32 2147483647, %v481
    %vm703 = vcmp.eq.f32.partialorder %v702, 8.507059e+37
    %v704 = vand.u32 %v481, 2147483648
    %v705 = vor.u32 1.1754944e-38, %v704
    %v706 = vsel %vm703, %v705, %v701
    %v707 = vmul.f32 %v351, %v706
    %v708 = vrcp.pop %v482
    %v709 = vmul.f32 %v482, %v708
    %v710 = vsub.f32 1.0, %v709
    %v711 = vmul.f32 %v708, %v710
    %v712 = vadd.f32 %v708, %v711
    %vm713 = vweird.f32 %v482
    %vm714 = vweird.f32 %v708
    %vm715 = vmor %vm713, %vm714
    %v716 = vsel %vm715, %v708, %v712
    %v717 = vand.u32 2147483647, %v482
    %vm718 = vcmp.eq.f32.partialorder %v717, 8.507059e+37
    %v719 = vand.u32 %v482, 2147483648
    %v720 = vor.u32 1.1754944e-38, %v719
    %v721 = vsel %vm718, %v720, %v716
    %v722 = vmul.f32 %v354, %v721
    %v723 = vld [vmem:[%s3] sm:$0xff]
    %v724 = vld [vmem:[%s3 + $0x8] sm:$0xff]
    %v725 = vld [vmem:[%s3 + $0x10] sm:$0xff]
    %v726 = vld [vmem:[%s3 + $0x18] sm:$0xff]
    %v727 = vld [vmem:[%s3 + $0x20] sm:$0xff]
    %v728 = vld [vmem:[%s3 + $0x28] sm:$0xff]
    %v729 = vld [vmem:[%s3 + $0x30] sm:$0xff]
    %v730 = vld [vmem:[%s3 + $0x38] sm:$0xff]
    %v731 = vld [vmem:[%s3 + $0x40] sm:$0xff]
    %v732 = vld [vmem:[%s3 + $0x48] sm:$0xff]
    %v733 = vld [vmem:[%s3 + $0x50] sm:$0xff]
    %v734 = vld [vmem:[%s3 + $0x58] sm:$0xff]
    %v735 = vld [vmem:[%s3 + $0x60] sm:$0xff]
    %v736 = vld [vmem:[%s3 + $0x68] sm:$0xff]
    %v737 = vld [vmem:[%s3 + $0x70] sm:$0xff]
    %v738 = vld [vmem:[%s3 + $0x78] sm:$0xff]
    %v739 = vadd.f32 %v723, %v497
    %v740 = vadd.f32 %v724, %v512
    %v741 = vadd.f32 %v725, %v527
    %v742 = vadd.f32 %v726, %v542
    %v743 = vadd.f32 %v727, %v557
    %v744 = vadd.f32 %v728, %v572
    %v745 = vadd.f32 %v729, %v587
    %v746 = vadd.f32 %v730, %v602
    %v747 = vadd.f32 %v731, %v617
    %v748 = vadd.f32 %v732, %v632
    %v749 = vadd.f32 %v733, %v647
    %v750 = vadd.f32 %v734, %v662
    %v751 = vadd.f32 %v735, %v677
    %v752 = vadd.f32 %v736, %v692
    %v753 = vadd.f32 %v737, %v707
    %v754 = vadd.f32 %v738, %v722
    %vm755 = vcmask 7168
    %756 = vst.msk [vmem:[%s3] sm:$0xff] %vm755, %v739
    %757 = vst.msk [vmem:[%s3 + $0x8] sm:$0xff] %vm755, %v740
    %758 = vst.msk [vmem:[%s3 + $0x10] sm:$0xff] %vm755, %v741
    %759 = vst.msk [vmem:[%s3 + $0x18] sm:$0xff] %vm755, %v742
    %760 = vst.msk [vmem:[%s3 + $0x20] sm:$0xff] %vm755, %v743
    %761 = vst.msk [vmem:[%s3 + $0x28] sm:$0xff] %vm755, %v744
    %762 = vst.msk [vmem:[%s3 + $0x30] sm:$0xff] %vm755, %v745
    %763 = vst.msk [vmem:[%s3 + $0x38] sm:$0xff] %vm755, %v746
    %764 = vst.msk [vmem:[%s3 + $0x40] sm:$0xff] %vm755, %v747
    %765 = vst.msk [vmem:[%s3 + $0x48] sm:$0xff] %vm755, %v748
    %766 = vst.msk [vmem:[%s3 + $0x50] sm:$0xff] %vm755, %v749
    %767 = vst.msk [vmem:[%s3 + $0x58] sm:$0xff] %vm755, %v750
    %768 = vst.msk [vmem:[%s3 + $0x60] sm:$0xff] %vm755, %v751
    %769 = vst.msk [vmem:[%s3 + $0x68] sm:$0xff] %vm755, %v752
    %770 = vst.msk [vmem:[%s3 + $0x70] sm:$0xff] %vm755, %v753
    %771 = vst.msk [vmem:[%s3 + $0x78] sm:$0xff] %vm755, %v754
    %v772 = vld [vmem:[%s4] sm:$0xff]
    %v773 = vld [vmem:[%s4 + $0x8] sm:$0xff]
    %v774 = vld [vmem:[%s4 + $0x10] sm:$0xff]
    %v775 = vld [vmem:[%s4 + $0x18] sm:$0xff]
    %v776 = vld [vmem:[%s4 + $0x20] sm:$0xff]
    %v777 = vld [vmem:[%s4 + $0x28] sm:$0xff]
    %v778 = vld [vmem:[%s4 + $0x30] sm:$0xff]
    %v779 = vld [vmem:[%s4 + $0x38] sm:$0xff]
    %v780 = vld [vmem:[%s4 + $0x40] sm:$0xff]
    %v781 = vld [vmem:[%s4 + $0x48] sm:$0xff]
    %v782 = vld [vmem:[%s4 + $0x50] sm:$0xff]
    %v783 = vld [vmem:[%s4 + $0x58] sm:$0xff]
    %v784 = vld [vmem:[%s4 + $0x60] sm:$0xff]
    %v785 = vld [vmem:[%s4 + $0x68] sm:$0xff]
    %v786 = vld [vmem:[%s4 + $0x70] sm:$0xff]
    %v787 = vld [vmem:[%s4 + $0x78] sm:$0xff]
    %v788 = vmul.f32 %v497, %v421
    %v789 = vmul.f32 %v512, %v424
    %v790 = vmul.f32 %v527, %v427
    %v791 = vmul.f32 %v542, %v430
    %v792 = vmul.f32 %v557, %v433
    %v793 = vmul.f32 %v572, %v436
    %v794 = vmul.f32 %v587, %v439
    %v795 = vmul.f32 %v602, %v442
    %v796 = vmul.f32 %v617, %v445
    %v797 = vmul.f32 %v632, %v448
    %v798 = vmul.f32 %v647, %v451
    %v799 = vmul.f32 %v662, %v454
    %v800 = vmul.f32 %v677, %v457
    %v801 = vmul.f32 %v692, %v460
    %v802 = vmul.f32 %v707, %v463
    %v803 = vmul.f32 %v722, %v466
    %v804 = vadd.f32 %v772, %v788
    %v805 = vadd.f32 %v773, %v789
    %v806 = vadd.f32 %v774, %v790
    %v807 = vadd.f32 %v775, %v791
    %v808 = vadd.f32 %v776, %v792
    %v809 = vadd.f32 %v777, %v793
    %v810 = vadd.f32 %v778, %v794
    %v811 = vadd.f32 %v779, %v795
    %v812 = vadd.f32 %v780, %v796
    %v813 = vadd.f32 %v781, %v797
    %v814 = vadd.f32 %v782, %v798
    %v815 = vadd.f32 %v783, %v799
    %v816 = vadd.f32 %v784, %v800
    %v817 = vadd.f32 %v785, %v801
    %v818 = vadd.f32 %v786, %v802
    %v819 = vadd.f32 %v787, %v803
    %820 = vst.msk [vmem:[%s4] sm:$0xff] %vm755, %v804
    %821 = vst.msk [vmem:[%s4 + $0x8] sm:$0xff] %vm755, %v805
    %822 = vst.msk [vmem:[%s4 + $0x10] sm:$0xff] %vm755, %v806
    %823 = vst.msk [vmem:[%s4 + $0x18] sm:$0xff] %vm755, %v807
    %824 = vst.msk [vmem:[%s4 + $0x20] sm:$0xff] %vm755, %v808
    %825 = vst.msk [vmem:[%s4 + $0x28] sm:$0xff] %vm755, %v809
    %826 = vst.msk [vmem:[%s4 + $0x30] sm:$0xff] %vm755, %v810
    %827 = vst.msk [vmem:[%s4 + $0x38] sm:$0xff] %vm755, %v811
    %828 = vst.msk [vmem:[%s4 + $0x40] sm:$0xff] %vm755, %v812
    %829 = vst.msk [vmem:[%s4 + $0x48] sm:$0xff] %vm755, %v813
    %830 = vst.msk [vmem:[%s4 + $0x50] sm:$0xff] %vm755, %v814
    %831 = vst.msk [vmem:[%s4 + $0x58] sm:$0xff] %vm755, %v815
    %832 = vst.msk [vmem:[%s4 + $0x60] sm:$0xff] %vm755, %v816
    %833 = vst.msk [vmem:[%s4 + $0x68] sm:$0xff] %vm755, %v817
    %834 = vst.msk [vmem:[%s4 + $0x70] sm:$0xff] %vm755, %v818
    %835 = vst.msk [vmem:[%s4 + $0x78] sm:$0xff] %vm755, %v819
    // Predicated region
    $region30: #{masked_smooth_l1_loss_weighted.1} parent=1 // pred_check
      _
    $region31: #{masked_smooth_l1_loss_weighted.1} parent=1 // pred_check_branch
      %837 = sbr.rel (0) target = $region33
    $region32: #{masked_smooth_l1_loss_weighted.1} parent=1 // pred_region
      _
    $region33: #{masked_smooth_l1_loss_weighted.1} parent=1 // pred_fallthru
      _
    // Predicated region
    $region34: #{masked_smooth_l1_loss_weighted.1} parent=1 // pred_check
      _
    $region35: #{masked_smooth_l1_loss_weighted.1} parent=1 // pred_check_branch
      %839 = sbr.rel (0) target = $region37
    $region36: #{masked_smooth_l1_loss_weighted.1} parent=1 // pred_region
      _
    $region37: #{masked_smooth_l1_loss_weighted.1} parent=1 // pred_fallthru
      _
    // Predicated region
    $region38: #{masked_smooth_l1_loss_weighted.1} parent=1 // pred_check
      _
    $region39: #{masked_smooth_l1_loss_weighted.1} parent=1 // pred_check_branch
      %841 = sbr.rel (0) target = $region41
    $region40: #{masked_smooth_l1_loss_weighted.1} parent=1 // pred_region
      _
    $region41: #{masked_smooth_l1_loss_weighted.1} parent=1 // pred_fallthru
      _
    // Predicated region
    $region42: #{masked_smooth_l1_loss_weighted.1} parent=1 // pred_check
      _
    $region43: #{masked_smooth_l1_loss_weighted.1} parent=1 // pred_check_branch
      %843 = sbr.rel (0) target = $region45
    $region44: #{masked_smooth_l1_loss_weighted.1} parent=1 // pred_region
      _
    $region45: #{masked_smooth_l1_loss_weighted.1} parent=1 // pred_fallthru
      _
    %844 = vsyncpa [#allocation3], 1
    %845 = vsyncpa [#allocation5], 1

</llo_original>
